<compile_context>
chip_gen: v5e
topology: v5e:2x2
jax: 0.10.0
libtpu: 0.0.40
codegen_flags: <defaults>
</compile_context>

<pallas_src>
import math
import jax
import jax.numpy as jnp
from jax.experimental import pallas as pl
from jax.experimental.pallas import tpu as pltpu


def critic_kernel(s_ref, a_ref, w1s_ref, w1a_ref, b1_ref, w2_ref, b2_ref,
                  w3t_ref, b3_ref, out_ref):
    cd = w1s_ref.dtype  # bf16 compute dtype

    # fc1 with fused concat: [state|action] @ W1 == state @ W1_s + action @ W1_a.
    # Inputs arrive f32 from HBM and are cast to bf16 here, in VMEM.
    h1 = jnp.dot(s_ref[...].astype(cd), w1s_ref[...],
                 preferred_element_type=jnp.float32)
    h1 = h1 + jnp.dot(a_ref[...].astype(cd), w1a_ref[...],
                      preferred_element_type=jnp.float32)
    h1 = jnp.maximum(h1 + b1_ref[...], 0.0)

    # fc2
    h2 = jnp.dot(h1.astype(cd), w2_ref[...], preferred_element_type=jnp.float32)
    h2 = jnp.maximum(h2 + b2_ref[...], 0.0)

    # fc3, lane-dense: (1, H) contracted with (tile, H) on H -> (1, tile),
    # i.e. batch lives on the lane axis -> full-lane unmasked stores.
    q = jax.lax.dot_general(
        w3t_ref[...], h2.astype(cd),
        dimension_numbers=(((1,), (1,)), ((), ())),
        preferred_element_type=jnp.float32)
    out_ref[...] = (q + b3_ref[0, 0]).astype(out_ref.dtype)


def prepare_critic_params(params, state_size, compute_dtype=jnp.bfloat16):
    """One-time weight prep (hoisted out of the per-call path).

    Splits fc1's weight for the fused concat, transposes fc3's weight to (1, H),
    and casts weights to the compute dtype / biases to f32.
    """
    w1, b1, w2, b2, w3, b3 = params
    cd = compute_dtype
    w1s = jnp.asarray(w1, jnp.float32)[:state_size].astype(cd)   # (S, H)
    w1a = jnp.asarray(w1, jnp.float32)[state_size:].astype(cd)   # (A, H)
    b1c = jnp.asarray(b1, jnp.float32).reshape(1, -1)            # (1, H)
    w2c = jnp.asarray(w2, cd)                                    # (H, H)
    b2c = jnp.asarray(b2, jnp.float32).reshape(1, -1)            # (1, H)
    w3t = jnp.asarray(w3, jnp.float32).T.astype(cd)              # (1, H)
    b3s = jnp.asarray(b3, jnp.float32).reshape(1, 1)             # scalar -> SMEM
    return (w1s, w1a, b1c, w2c, b2c, w3t, b3s)


def _resident_spec(block_shape):
    """Weight BlockSpec: constant index_map (VMEM-resident across grid steps),
    single-buffered when the installed Pallas supports pipeline_mode."""
    try:
        return pl.BlockSpec(block_shape, lambda i: (0, 0),
                            pipeline_mode=pl.Buffered(1))
    except TypeError:
        return pl.BlockSpec(block_shape, lambda i: (0, 0))


def critic_forward(state, action, prepared_params, *, batch_tile=512):
    """Critic forward. state: [B, S] f32, action: [B, A] f32 -> [B, 1] f32.

    `prepared_params` comes from prepare_critic_params(). jit-compatible.
    """
    w1s, w1a, b1c, w2c, b2c, w3t, b3s = prepared_params
    B, S = state.shape
    A = action.shape[1]
    H = w1s.shape[1]

    def round_up(x, m):
        return (x + m - 1) // m * m

    # --- batch tiling ------------------------------------------------------
    # Always a 128-multiple so the (1, tile) output block is lane-dense.
    Bp_min = round_up(B, 128)
    tile = round_up(batch_tile, 128)
    if Bp_min >= 256:
        # keep >= 2 grid steps so v7x's two TensorCores both get work
        tile = min(tile, round_up(pl.cdiv(Bp_min, 2), 128))
    eff_tile = min(tile, Bp_min)
    Bp = round_up(B, eff_tile)
    grid = (Bp // eff_tile,)

    # Activations stay float32 (cast happens inside the kernel); pad only when
    # the batch is not already a tile multiple.
    state_p = jnp.asarray(state, jnp.float32)
    action_p = jnp.asarray(action, jnp.float32)
    if Bp != B:
        state_p = jnp.pad(state_p, ((0, Bp - B), (0, 0)))
        action_p = jnp.pad(action_p, ((0, Bp - B), (0, 0)))

    # --- VMEM budget (only override the default scoped limit when needed) ---
    act_bytes = 2 * eff_tile * (S + A) * 4          # double-buffered f32 inputs
    out_bytes = 2 * eff_tile * 4                    # double-buffered f32 output
    wgt_bytes = ((S + A) * H + H * H + H) * 2 + 3 * H * 4
    tmp_bytes = 2 * eff_tile * max(H, 128) * 4      # h1 / h2 temporaries
    vmem_est = act_bytes + out_bytes + wgt_bytes + tmp_bytes
    compiler_kwargs = dict(dimension_semantics=("parallel",))
    if vmem_est > (24 << 20):
        compiler_kwargs["vmem_limit_bytes"] = int(min(2 * vmem_est, 64 << 20))

    out = pl.pallas_call(
        critic_kernel,
        out_shape=jax.ShapeDtypeStruct((1, Bp), jnp.float32),
        grid_spec=pl.GridSpec(
            grid=grid,
            in_specs=[
                # activations: tiled over batch rows (f32, cast in-kernel)
                pl.BlockSpec((eff_tile, S), lambda i: (i, 0)),
                pl.BlockSpec((eff_tile, A), lambda i: (i, 0)),
                # weights / biases: full, resident across grid steps
                _resident_spec((S, H)),
                _resident_spec((A, H)),
                _resident_spec((1, H)),
                _resident_spec((H, H)),
                _resident_spec((1, H)),
                _resident_spec((1, H)),
                # scalar fc3 bias in SMEM (avoids a padded (8,128) VMEM tile)
                pl.BlockSpec(memory_space=pltpu.MemorySpace.SMEM),
            ],
            # lane-dense output: batch lives on the lane axis
            out_specs=pl.BlockSpec((1, eff_tile), lambda i: (0, i)),
        ),
        compiler_params=pltpu.CompilerParams(**compiler_kwargs),
    )(state_p, action_p, w1s, w1a, b1c, w2c, b2c, w3t, b3s)

    # (1, Bp) row -> (B, 1) column; layout glue stays outside the kernel.
    return out.reshape(Bp, 1)[:B]


def init_critic_params(key, state_size, action_size, hidden_size):
    """Deterministic init mimicking PyTorch nn.Linear default (U(+-1/sqrt(fan_in)))."""
    def linear_init(k, fan_in, fan_out):
        kw, kb = jax.random.split(k)
        bound = 1.0 / math.sqrt(fan_in)
        # stored as [in, out] so the kernel computes x @ W + b
        w = jax.random.uniform(kw, (fan_in, fan_out), jnp.float32, -bound, bound)
        b = jax.random.uniform(kb, (1, fan_out), jnp.float32, -bound, bound)
        return w, b

    k1, k2, k3 = jax.random.split(key, 3)
    in_dim = state_size + action_size
    w1, b1 = linear_init(k1, in_dim, hidden_size)
    w2, b2 = linear_init(k2, hidden_size, hidden_size)
    w3, b3 = linear_init(k3, hidden_size, 1)
    return (w1, b1, w2, b2, w3, b3)


def critic_ref(state, action, params):
    """Pure-JAX float32 reference for correctness check."""
    w1, b1, w2, b2, w3, b3 = params
    x = jnp.concatenate([state, action], axis=1)
    x = jnp.maximum(x @ w1 + b1, 0.0)
    x = jnp.maximum(x @ w2 + b2, 0.0)
    return x @ w3 + b3


if __name__ == "__main__":
    state_size, action_size, hidden_size = 8, 4, 32
    batch = 64

    key = jax.random.PRNGKey(0)
    kp, ks, ka = jax.random.split(key, 3)

    params = init_critic_params(kp, state_size, action_size, hidden_size)
    # One-time weight prep (cached across forward calls in real use).
    prepared = prepare_critic_params(params, state_size)

    state = jax.random.normal(ks, (batch, state_size), jnp.float32)
    action = jax.random.normal(ka, (batch, action_size), jnp.float32)

    q = critic_forward(state, action, prepared)
    q = jax.block_until_ready(q)

    q_ref = critic_ref(state, action, params)
    assert q.shape == (batch, 1)
    # bf16 MXU inputs with f32 accumulation -> loose tolerance vs f32 reference.
    assert jnp.allclose(q, q_ref, atol=5e-2, rtol=5e-2), "mismatch vs reference"

    print("KERNEL_OK")
</pallas_src>

<mosaic_0001>
module attributes {stable_mosaic.version = 11 : i64} {
  func.func @critic_kernel(%arg0: i32, %arg1: memref<128x8xf32, #tpu.memory_space<vmem>>, %arg2: memref<128x4xf32, #tpu.memory_space<vmem>>, %arg3: memref<8x32xbf16, #tpu.memory_space<vmem>>, %arg4: memref<4x32xbf16, #tpu.memory_space<vmem>>, %arg5: memref<1x32xf32, #tpu.memory_space<vmem>>, %arg6: memref<32x32xbf16, #tpu.memory_space<vmem>>, %arg7: memref<1x32xf32, #tpu.memory_space<vmem>>, %arg8: memref<1x32xbf16, #tpu.memory_space<vmem>>, %arg9: memref<1x1xf32, #tpu.memory_space<smem>>, %arg10: memref<1x128xf32, #tpu.memory_space<vmem>>) attributes {dimension_semantics = [#tpu.dimension_semantics<parallel>], iteration_bounds = array<i64: 1>, scalar_prefetch = 0 : i64, scratch_operands = 0 : i64, tpu.core_type = #tpu.core_type<tc>, window_params = [{transform_indices = @transform_0, window_bounds = array<i64: 128, 8>}, {transform_indices = @transform_1, window_bounds = array<i64: 128, 4>}, {pipeline_mode = #tpu.pipeline_mode<synchronous>, transform_indices = @transform_2, window_bounds = array<i64: 8, 32>}, {pipeline_mode = #tpu.pipeline_mode<synchronous>, transform_indices = @transform_3, window_bounds = array<i64: 4, 32>}, {pipeline_mode = #tpu.pipeline_mode<synchronous>, transform_indices = @transform_4, window_bounds = array<i64: 1, 32>}, {pipeline_mode = #tpu.pipeline_mode<synchronous>, transform_indices = @transform_5, window_bounds = array<i64: 32, 32>}, {pipeline_mode = #tpu.pipeline_mode<synchronous>, transform_indices = @transform_6, window_bounds = array<i64: 1, 32>}, {pipeline_mode = #tpu.pipeline_mode<synchronous>, transform_indices = @transform_7, window_bounds = array<i64: 1, 32>}, {transform_indices = @transform_8, window_bounds = array<i64: 1, 1>}, {transform_indices = @transform_9, window_bounds = array<i64: 1, 128>}]} {
    %c0 = arith.constant 0 : index
    %c0_0 = arith.constant 0 : index
    %0 = vector.load %arg1[%c0, %c0_0] : memref<128x8xf32, #tpu.memory_space<vmem>>, vector<128x8xf32>
    %1 = arith.truncf %0 : vector<128x8xf32> to vector<128x8xbf16>
    %c0_1 = arith.constant 0 : index
    %c0_2 = arith.constant 0 : index
    %2 = vector.load %arg3[%c0_1, %c0_2] : memref<8x32xbf16, #tpu.memory_space<vmem>>, vector<8x32xbf16>
    %cst = arith.constant dense<0.000000e+00> : vector<128x32xf32>
    %3 = tpu.matmul %1, %2, %cst {dimension_numbers = #tpu.dot_dimension_numbers<[1], [0], [0], [1], [0, 0, 1, 1], [], []>} : vector<128x8xbf16>, vector<8x32xbf16>, vector<128x32xf32> -> vector<128x32xf32>
    %c0_3 = arith.constant 0 : index
    %c0_4 = arith.constant 0 : index
    %4 = vector.load %arg2[%c0_3, %c0_4] : memref<128x4xf32, #tpu.memory_space<vmem>>, vector<128x4xf32>
    %5 = arith.truncf %4 : vector<128x4xf32> to vector<128x4xbf16>
    %c0_5 = arith.constant 0 : index
    %c0_6 = arith.constant 0 : index
    %6 = vector.load %arg4[%c0_5, %c0_6] : memref<4x32xbf16, #tpu.memory_space<vmem>>, vector<4x32xbf16>
    %cst_7 = arith.constant dense<0.000000e+00> : vector<128x32xf32>
    %7 = tpu.matmul %5, %6, %cst_7 {dimension_numbers = #tpu.dot_dimension_numbers<[1], [0], [0], [1], [0, 0, 1, 1], [], []>} : vector<128x4xbf16>, vector<4x32xbf16>, vector<128x32xf32> -> vector<128x32xf32>
    %8 = arith.addf %3, %7 : vector<128x32xf32>
    %c0_8 = arith.constant 0 : index
    %c0_9 = arith.constant 0 : index
    %9 = vector.load %arg5[%c0_8, %c0_9] : memref<1x32xf32, #tpu.memory_space<vmem>>, vector<1x32xf32>
    %10 = vector.broadcast %9 : vector<1x32xf32> to vector<128x32xf32>
    %11 = arith.addf %8, %10 : vector<128x32xf32>
    %cst_10 = arith.constant 0.000000e+00 : f32
    %12 = vector.broadcast %cst_10 : f32 to vector<128x32xf32>
    %13 = arith.maximumf %11, %12 : vector<128x32xf32>
    %14 = arith.truncf %13 : vector<128x32xf32> to vector<128x32xbf16>
    %c0_11 = arith.constant 0 : index
    %c0_12 = arith.constant 0 : index
    %15 = vector.load %arg6[%c0_11, %c0_12] : memref<32x32xbf16, #tpu.memory_space<vmem>>, vector<32x32xbf16>
    %cst_13 = arith.constant dense<0.000000e+00> : vector<128x32xf32>
    %16 = tpu.matmul %14, %15, %cst_13 {dimension_numbers = #tpu.dot_dimension_numbers<[1], [0], [0], [1], [0, 0, 1, 1], [], []>} : vector<128x32xbf16>, vector<32x32xbf16>, vector<128x32xf32> -> vector<128x32xf32>
    %c0_14 = arith.constant 0 : index
    %c0_15 = arith.constant 0 : index
    %17 = vector.load %arg7[%c0_14, %c0_15] : memref<1x32xf32, #tpu.memory_space<vmem>>, vector<1x32xf32>
    %18 = vector.broadcast %17 : vector<1x32xf32> to vector<128x32xf32>
    %19 = arith.addf %16, %18 : vector<128x32xf32>
    %cst_16 = arith.constant 0.000000e+00 : f32
    %20 = vector.broadcast %cst_16 : f32 to vector<128x32xf32>
    %21 = arith.maximumf %19, %20 : vector<128x32xf32>
    %c0_17 = arith.constant 0 : index
    %c0_18 = arith.constant 0 : index
    %22 = vector.load %arg8[%c0_17, %c0_18] : memref<1x32xbf16, #tpu.memory_space<vmem>>, vector<1x32xbf16>
    %23 = arith.truncf %21 : vector<128x32xf32> to vector<128x32xbf16>
    %cst_19 = arith.constant dense<0.000000e+00> : vector<1x128xf32>
    %24 = tpu.matmul %22, %23, %cst_19 {dimension_numbers = #tpu.dot_dimension_numbers<[1], [1], [0], [0], [0, 0, 1, 0], [], []>} : vector<1x32xbf16>, vector<128x32xbf16>, vector<1x128xf32> -> vector<1x128xf32>
    %c0_20 = arith.constant 0 : index
    %c0_21 = arith.constant 0 : index
    %25 = memref.load %arg9[%c0_20, %c0_21] : memref<1x1xf32, #tpu.memory_space<smem>>
    %26 = vector.broadcast %25 : f32 to vector<1x128xf32>
    %27 = arith.addf %24, %26 : vector<1x128xf32>
    %c0_22 = arith.constant 0 : index
    %c0_23 = arith.constant 0 : index
    %28 = vector.load %arg10[%c0_22, %c0_23] : memref<1x128xf32, #tpu.memory_space<vmem>>, vector<1x128xf32>
    tpu.vector_store %arg10[%c0_22, %c0_23], %27 {strides = array<i32>} : memref<1x128xf32, #tpu.memory_space<vmem>>, vector<1x128xf32>,
    return
  }
  func.func @transform_0(%arg0: i32) -> (i32, i32) {
    %c0_i32 = arith.constant 0 : i32
    %c0_i32_0 = arith.constant 0 : i32
    return %arg0, %c0_i32 : i32, i32
  }
  func.func @transform_1(%arg0: i32) -> (i32, i32) {
    %c0_i32 = arith.constant 0 : i32
    %c0_i32_0 = arith.constant 0 : i32
    return %arg0, %c0_i32 : i32, i32
  }
  func.func @transform_2(%arg0: i32) -> (i32, i32) {
    %c0_i32 = arith.constant 0 : i32
    %c0_i32_0 = arith.constant 0 : i32
    %c0_i32_1 = arith.constant 0 : i32
    return %c0_i32, %c0_i32_0 : i32, i32
  }
  func.func @transform_3(%arg0: i32) -> (i32, i32) {
    %c0_i32 = arith.constant 0 : i32
    %c0_i32_0 = arith.constant 0 : i32
    %c0_i32_1 = arith.constant 0 : i32
    return %c0_i32, %c0_i32_0 : i32, i32
  }
  func.func @transform_4(%arg0: i32) -> (i32, i32) {
    %c0_i32 = arith.constant 0 : i32
    %c0_i32_0 = arith.constant 0 : i32
    %c0_i32_1 = arith.constant 0 : i32
    return %c0_i32, %c0_i32_0 : i32, i32
  }
  func.func @transform_5(%arg0: i32) -> (i32, i32) {
    %c0_i32 = arith.constant 0 : i32
    %c0_i32_0 = arith.constant 0 : i32
    %c0_i32_1 = arith.constant 0 : i32
    return %c0_i32, %c0_i32_0 : i32, i32
  }
  func.func @transform_6(%arg0: i32) -> (i32, i32) {
    %c0_i32 = arith.constant 0 : i32
    %c0_i32_0 = arith.constant 0 : i32
    %c0_i32_1 = arith.constant 0 : i32
    return %c0_i32, %c0_i32_0 : i32, i32
  }
  func.func @transform_7(%arg0: i32) -> (i32, i32) {
    %c0_i32 = arith.constant 0 : i32
    %c0_i32_0 = arith.constant 0 : i32
    %c0_i32_1 = arith.constant 0 : i32
    return %c0_i32, %c0_i32_0 : i32, i32
  }
  func.func @transform_8(%arg0: i32) -> (i32, i32) {
    %c0_i32 = arith.constant 0 : i32
    %c0_i32_0 = arith.constant 0 : i32
    %c0_i32_1 = arith.constant 0 : i32
    return %c0_i32, %c0_i32_0 : i32, i32
  }
  func.func @transform_9(%arg0: i32) -> (i32, i32) {
    %c0_i32 = arith.constant 0 : i32
    %c0_i32_0 = arith.constant 0 : i32
    return %c0_i32, %arg0 : i32, i32
  }
}

</mosaic_0001>

<llo_original>
// kernel: tpu_custom_call.1
$region0: #{tpu_custom_call.1}
  #allocation0 [shape = 'u32[]', space=smem, size = 0x4, offset = 0x4, fixed_abs, tag = 'smem constant byte address 0x4 - core index']
  #allocation1 [shape = 'u32[72,128]{1,0:T(1,128)}', space=vmem, size = 0x9000, scoped, tag = 'internal scratch']
  #allocation2 [shape = 'f32[1,1]{1,0:T(1,128)S(6)}', space=smem, size = 0x200, scoped, tag = 'scoped memory for tpu_custom_call.1']
  %s0 = inlined_call_operand.vmem [shape: f32[128,8], index: 0, kind: input, shape index: {}]
  %s1 = inlined_call_operand.vmem [shape: f32[128,4], index: 1, kind: input, shape index: {}]
  %s2 = inlined_call_operand.vmem [shape: bf16[8,32], index: 2, kind: input, shape index: {}]
  %s3 = inlined_call_operand.vmem [shape: bf16[4,32], index: 3, kind: input, shape index: {}]
  %s4 = inlined_call_operand.vmem [shape: f32[1,32], index: 4, kind: input, shape index: {}]
  %s5 = inlined_call_operand.vmem [shape: bf16[32,32], index: 5, kind: input, shape index: {}]
  %s6 = inlined_call_operand.vmem [shape: f32[1,32], index: 6, kind: input, shape index: {}]
  %s7 = inlined_call_operand.vmem [shape: bf16[1,32], index: 7, kind: input, shape index: {}]
  %s8 = inlined_call_operand.<no memory space> [shape: f32[1,1], index: 8, kind: input, shape index: {}]
  %s9 = inlined_call_operand.hbm [shape: f32[1,128], index: 9, kind: output, shape index: {}]
  %s10 = sld [smem:[#allocation0]]
  $region46: #{tpu_custom_call.1} parent=0
    _
  %s12 = ssub.s32 1, %s10
  %s13 = scalar_select 0, %s12, %s10
  %14 = sst [smem:[#allocation2]] %s8
  $region1: #{tpu_custom_call.1} parent=0
    #allocation3 [shape = 'u8[512]{0}', space=vmem, size = 0x400, scoped, tag = 'output window, operand 0, single buffered']
    #allocation4 [shape = 's32[1]{0}', space=sflag, size = 0x4, scoped, tag = 'scoped memory for tpu_custom_call.1']
    %15 = vsyncpa [#allocation4], 0
    // Predicated region
    $region2: #{tpu_custom_call.1} parent=1 // pred_check
      _
    $region3: #{tpu_custom_call.1} parent=1 // pred_check_branch
      %17 = sbr.rel (0) target = $region5
    $region4: #{tpu_custom_call.1} parent=1 // pred_region
      _
    $region5: #{tpu_custom_call.1} parent=1 // pred_fallthru
      _
    // Predicated region
    $region6: #{tpu_custom_call.1} parent=1 // pred_check
      _
    $region7: #{tpu_custom_call.1} parent=1 // pred_check_branch
      %19 = sbr.rel (0) target = $region9
    $region8: #{tpu_custom_call.1} parent=1 // pred_region
      _
    $region9: #{tpu_custom_call.1} parent=1 // pred_fallthru
      _
    // Predicated region
    $region10: #{tpu_custom_call.1} parent=1 // pred_check
      _
    $region11: #{tpu_custom_call.1} parent=1 // pred_check_branch
      %21 = sbr.rel (0) target = $region13
    $region12: #{tpu_custom_call.1} parent=1 // pred_region
      _
    $region13: #{tpu_custom_call.1} parent=1 // pred_fallthru
      _
    // Predicated region
    $region14: #{tpu_custom_call.1} parent=1 // pred_check
      _
    $region15: #{tpu_custom_call.1} parent=1 // pred_check_branch
      %23 = sbr.rel (0) target = $region17
    $region16: #{tpu_custom_call.1} parent=1 // pred_region
      _
    $region17: #{tpu_custom_call.1} parent=1 // pred_fallthru
      _
    // Predicated region
    $region18: #{tpu_custom_call.1} parent=1 // pred_check
      _
    $region19: #{tpu_custom_call.1} parent=1 // pred_check_branch
      %25 = sbr.rel (0) target = $region21
    $region20: #{tpu_custom_call.1} parent=1 // pred_region
      _
    $region21: #{tpu_custom_call.1} parent=1 // pred_fallthru
      _
    // Predicated region
    $region22: #{tpu_custom_call.1} parent=1 // pred_check
      _
    $region23: #{tpu_custom_call.1} parent=1 // pred_check_branch
      %27 = sbr.rel (0) target = $region25
    $region24: #{tpu_custom_call.1} parent=1 // pred_region
      _
    $region25: #{tpu_custom_call.1} parent=1 // pred_fallthru
      _
    // Predicated region
    $region26: #{tpu_custom_call.1} parent=1 // pred_check
      _
    $region27: #{tpu_custom_call.1} parent=1 // pred_check_branch
      %29 = sbr.rel (0) target = $region29
    $region28: #{tpu_custom_call.1} parent=1 // pred_region
      _
    $region29: #{tpu_custom_call.1} parent=1 // pred_fallthru
      _
    // Predicated region
    $region30: #{tpu_custom_call.1} parent=1 // pred_check
      _
    $region31: #{tpu_custom_call.1} parent=1 // pred_check_branch
      %31 = sbr.rel (0) target = $region33
    $region32: #{tpu_custom_call.1} parent=1 // pred_region
      _
    $region33: #{tpu_custom_call.1} parent=1 // pred_fallthru
      _
    // Predicated region
    $region34: #{tpu_custom_call.1} parent=1 // pred_check
      _
    $region35: #{tpu_custom_call.1} parent=1 // pred_check_branch
      %33 = sbr.rel (0) target = $region37
    $region36: #{tpu_custom_call.1} parent=1 // pred_region
      _
    $region37: #{tpu_custom_call.1} parent=1 // pred_fallthru
      _
    %v35 = vld [vmem:[%s0] sm:$0xff]
    %v36 = vld [vmem:[%s0 + $0x8] sm:$0xff]
    %v37 = vld [vmem:[%s0 + $0x10] sm:$0xff]
    %v38 = vld [vmem:[%s0 + $0x18] sm:$0xff]
    %v39 = vld [vmem:[%s0 + $0x20] sm:$0xff]
    %v40 = vld [vmem:[%s0 + $0x28] sm:$0xff]
    %v41 = vld [vmem:[%s0 + $0x30] sm:$0xff]
    %v42 = vld [vmem:[%s0 + $0x38] sm:$0xff]
    %v43 = vld [vmem:[%s0 + $0x40] sm:$0xff]
    %v44 = vld [vmem:[%s0 + $0x48] sm:$0xff]
    %v45 = vld [vmem:[%s0 + $0x50] sm:$0xff]
    %v46 = vld [vmem:[%s0 + $0x58] sm:$0xff]
    %v47 = vld [vmem:[%s0 + $0x60] sm:$0xff]
    %v48 = vld [vmem:[%s0 + $0x68] sm:$0xff]
    %v49 = vld [vmem:[%s0 + $0x70] sm:$0xff]
    %v50 = vld [vmem:[%s0 + $0x78] sm:$0xff]
    %v51 = vpack.c.bf16 %v36, %v35
    %v52 = vpack.c.bf16 %v38, %v37
    %v53 = vpack.c.bf16 %v40, %v39
    %v54 = vpack.c.bf16 %v42, %v41
    %v55 = vpack.c.bf16 %v44, %v43
    %v56 = vpack.c.bf16 %v46, %v45
    %v57 = vpack.c.bf16 %v48, %v47
    %v58 = vpack.c.bf16 %v50, %v49
    %v59 = vld [vmem:[%s2] sm:$0xf]
    %v60 = vld [vmem:[%s1] sm:$0xff]
    %v61 = vld [vmem:[%s1 + $0x8] sm:$0xff]
    %v62 = vld [vmem:[%s1 + $0x10] sm:$0xff]
    %v63 = vld [vmem:[%s1 + $0x18] sm:$0xff]
    %v64 = vld [vmem:[%s1 + $0x20] sm:$0xff]
    %v65 = vld [vmem:[%s1 + $0x28] sm:$0xff]
    %v66 = vld [vmem:[%s1 + $0x30] sm:$0xff]
    %v67 = vld [vmem:[%s1 + $0x38] sm:$0xff]
    %v68 = vld [vmem:[%s1 + $0x40] sm:$0xff]
    %v69 = vld [vmem:[%s1 + $0x48] sm:$0xff]
    %v70 = vld [vmem:[%s1 + $0x50] sm:$0xff]
    %v71 = vld [vmem:[%s1 + $0x58] sm:$0xff]
    %v72 = vld [vmem:[%s1 + $0x60] sm:$0xff]
    %v73 = vld [vmem:[%s1 + $0x68] sm:$0xff]
    %v74 = vld [vmem:[%s1 + $0x70] sm:$0xff]
    %v75 = vld [vmem:[%s1 + $0x78] sm:$0xff]
    %v76 = vpack.c.bf16 %v61, %v60
    %v77 = vpack.c.bf16 %v63, %v62
    %v78 = vpack.c.bf16 %v65, %v64
    %v79 = vpack.c.bf16 %v67, %v66
    %v80 = vpack.c.bf16 %v69, %v68
    %v81 = vpack.c.bf16 %v71, %v70
    %v82 = vpack.c.bf16 %v73, %v72
    %v83 = vpack.c.bf16 %v75, %v74
    %v84 = vld [vmem:[%s3] sm:$0x3]
    %vm85 = vcmask 31744
    %v87 = vsel %vm85, %v76, 0
    %v90 = vsel %vm85, %v77, 0
    %v93 = vsel %vm85, %v78, 0
    %v96 = vsel %vm85, %v79, 0
    %v99 = vsel %vm85, %v80, 0
    %v102 = vsel %vm85, %v81, 0
    %v105 = vsel %vm85, %v82, 0
    %v108 = vsel %vm85, %v83, 0
    %vm110 = vcmask 1041408
    %v112 = vsel %vm110, %v84, 0
    %114 = vmatpush.bf16.msra.mxu0 0
    %115 = vmatpush.bf16.msra.mxu0 0
    %116 = vmatpush.bf16.msra.mxu0 0
    %117 = vmatpush.bf16.msra.mxu0 0
    %118 = vmatpush.bf16.msra.mxu0 0
    %119 = vmatpush.bf16.msra.mxu0 0
    %120 = vmatpush.bf16.msra.mxu0 0
    %121 = vmatpush.bf16.msra.mxu0 %v112
    %122 = vmatmul.bf16.gmra.mxu0 %v87
    %v123 = vpop.f32.mrf.mxu0
    %v124 = vadd.f32 0.0, %v123
    %v125 = vpop.f32.mrf.mxu0
    %v126 = vadd.f32 0.0, %v125
    %127 = vmatmul.bf16.gmra.mxu0 %v90
    %v128 = vpop.f32.mrf.mxu0
    %v129 = vadd.f32 0.0, %v128
    %v130 = vpop.f32.mrf.mxu0
    %v131 = vadd.f32 0.0, %v130
    %132 = vmatmul.bf16.gmra.mxu0 %v93
    %v133 = vpop.f32.mrf.mxu0
    %v134 = vadd.f32 0.0, %v133
    %v135 = vpop.f32.mrf.mxu0
    %v136 = vadd.f32 0.0, %v135
    %137 = vmatmul.bf16.gmra.mxu0 %v96
    %v138 = vpop.f32.mrf.mxu0
    %v139 = vadd.f32 0.0, %v138
    %v140 = vpop.f32.mrf.mxu0
    %v141 = vadd.f32 0.0, %v140
    %142 = vmatmul.bf16.gmra.mxu0 %v99
    %v143 = vpop.f32.mrf.mxu0
    %v144 = vadd.f32 0.0, %v143
    %v145 = vpop.f32.mrf.mxu0
    %v146 = vadd.f32 0.0, %v145
    %147 = vmatmul.bf16.gmra.mxu0 %v102
    %v148 = vpop.f32.mrf.mxu0
    %v149 = vadd.f32 0.0, %v148
    %v150 = vpop.f32.mrf.mxu0
    %v151 = vadd.f32 0.0, %v150
    %152 = vmatmul.bf16.gmra.mxu0 %v105
    %v153 = vpop.f32.mrf.mxu0
    %v154 = vadd.f32 0.0, %v153
    %v155 = vpop.f32.mrf.mxu0
    %v156 = vadd.f32 0.0, %v155
    %157 = vmatmul.bf16.gmra.mxu0 %v108
    %v158 = vpop.f32.mrf.mxu0
    %v159 = vadd.f32 0.0, %v158
    %v160 = vpop.f32.mrf.mxu0
    %v161 = vadd.f32 0.0, %v160
    %162 = vdwg.mxu0
    %vm163 = vcmask 64512
    %v165 = vsel %vm163, %v51, 0
    %v168 = vsel %vm163, %v52, 0
    %v171 = vsel %vm163, %v53, 0
    %v174 = vsel %vm163, %v54, 0
    %v177 = vsel %vm163, %v55, 0
    %v180 = vsel %vm163, %v56, 0
    %v183 = vsel %vm163, %v57, 0
    %v186 = vsel %vm163, %v58, 0
    %vm188 = vcmask 1043456
    %v190 = vsel %vm188, %v59, 0
    %192 = vmatpush.bf16.msra.mxu0 0
    %193 = vmatpush.bf16.msra.mxu0 0
    %194 = vmatpush.bf16.msra.mxu0 0
    %195 = vmatpush.bf16.msra.mxu0 0
    %196 = vmatpush.bf16.msra.mxu0 0
    %197 = vmatpush.bf16.msra.mxu0 0
    %198 = vmatpush.bf16.msra.mxu0 0
    %199 = vmatpush.bf16.msra.mxu0 %v190
    %200 = vmatmul.bf16.gmra.mxu0 %v165
    %v201 = vpop.f32.mrf.mxu0
    %v202 = vadd.f32 %v124, %v201
    %v203 = vpop.f32.mrf.mxu0
    %v204 = vadd.f32 %v126, %v203
    %205 = vmatmul.bf16.gmra.mxu0 %v168
    %v206 = vpop.f32.mrf.mxu0
    %v207 = vadd.f32 %v129, %v206
    %v208 = vpop.f32.mrf.mxu0
    %v209 = vadd.f32 %v131, %v208
    %210 = vmatmul.bf16.gmra.mxu0 %v171
    %v211 = vpop.f32.mrf.mxu0
    %v212 = vadd.f32 %v134, %v211
    %v213 = vpop.f32.mrf.mxu0
    %v214 = vadd.f32 %v136, %v213
    %215 = vmatmul.bf16.gmra.mxu0 %v174
    %v216 = vpop.f32.mrf.mxu0
    %v217 = vadd.f32 %v139, %v216
    %v218 = vpop.f32.mrf.mxu0
    %v219 = vadd.f32 %v141, %v218
    %220 = vmatmul.bf16.gmra.mxu0 %v177
    %v221 = vpop.f32.mrf.mxu0
    %v222 = vadd.f32 %v144, %v221
    %v223 = vpop.f32.mrf.mxu0
    %v224 = vadd.f32 %v146, %v223
    %225 = vmatmul.bf16.gmra.mxu0 %v180
    %v226 = vpop.f32.mrf.mxu0
    %v227 = vadd.f32 %v149, %v226
    %v228 = vpop.f32.mrf.mxu0
    %v229 = vadd.f32 %v151, %v228
    %230 = vmatmul.bf16.gmra.mxu0 %v183
    %v231 = vpop.f32.mrf.mxu0
    %v232 = vadd.f32 %v154, %v231
    %v233 = vpop.f32.mrf.mxu0
    %v234 = vadd.f32 %v156, %v233
    %235 = vmatmul.bf16.gmra.mxu0 %v186
    %v236 = vpop.f32.mrf.mxu0
    %v237 = vadd.f32 %v159, %v236
    %v238 = vpop.f32.mrf.mxu0
    %v239 = vadd.f32 %v161, %v238
    %240 = vdwg.mxu0
    %v241 = vld [vmem:[%s4] sm:$0x1]
    %v243 = vperm.slane %v241, 0
    %v245 = vadd.f32 %v202, %v243
    %v246 = vadd.f32 %v204, %v243
    %v247 = vadd.f32 %v207, %v243
    %v248 = vadd.f32 %v209, %v243
    %v249 = vadd.f32 %v212, %v243
    %v250 = vadd.f32 %v214, %v243
    %v251 = vadd.f32 %v217, %v243
    %v252 = vadd.f32 %v219, %v243
    %v253 = vadd.f32 %v222, %v243
    %v254 = vadd.f32 %v224, %v243
    %v255 = vadd.f32 %v227, %v243
    %v256 = vadd.f32 %v229, %v243
    %v257 = vadd.f32 %v232, %v243
    %v258 = vadd.f32 %v234, %v243
    %v259 = vadd.f32 %v237, %v243
    %v260 = vadd.f32 %v239, %v243
    %v261 = vmax.f32 %v245, 0.0
    %v262 = vmax.f32 %v246, 0.0
    %v263 = vmax.f32 %v247, 0.0
    %v264 = vmax.f32 %v248, 0.0
    %v265 = vmax.f32 %v249, 0.0
    %v266 = vmax.f32 %v250, 0.0
    %v267 = vmax.f32 %v251, 0.0
    %v268 = vmax.f32 %v252, 0.0
    %v269 = vmax.f32 %v253, 0.0
    %v270 = vmax.f32 %v254, 0.0
    %v271 = vmax.f32 %v255, 0.0
    %v272 = vmax.f32 %v256, 0.0
    %v273 = vmax.f32 %v257, 0.0
    %v274 = vmax.f32 %v258, 0.0
    %v275 = vmax.f32 %v259, 0.0
    %v276 = vmax.f32 %v260, 0.0
    %v277 = vpack.c.bf16 %v262, %v261
    %v278 = vpack.c.bf16 %v264, %v263
    %v279 = vpack.c.bf16 %v266, %v265
    %v280 = vpack.c.bf16 %v268, %v267
    %v281 = vpack.c.bf16 %v270, %v269
    %v282 = vpack.c.bf16 %v272, %v271
    %v283 = vpack.c.bf16 %v274, %v273
    %v284 = vpack.c.bf16 %v276, %v275
    %v285 = vld [vmem:[%s5] sm:$0xf]
    %v286 = vld [vmem:[%s5 + $0x4] sm:$0xf]
    %v287 = vld [vmem:[%s5 + $0x8] sm:$0xf]
    %v288 = vld [vmem:[%s5 + $0xc] sm:$0xf]
    %v289 = vld [vmem:[%s6] sm:$0x1]
    %v291 = vperm.slane %v289, 0
    %v297 = vunpack.c.l.b16 %v285
    %v298 = vunpack.c.l.b16 %v286
    %v299 = vunpack.c.l.b16 %v287
    %v300 = vunpack.c.l.b16 %v288
    %v301 = vpack.c.b16 %v298, %v297
    %v302 = vpack.c.b16 %v300, %v299
    %vm305 = vcmask 261120
    %v307 = vsel %vm305, %v277, 0
    %v310 = vsel %vm305, %v278, 0
    %v313 = vsel %vm305, %v279, 0
    %v316 = vsel %vm305, %v280, 0
    %v319 = vsel %vm305, %v281, 0
    %v322 = vsel %vm305, %v282, 0
    %v325 = vsel %vm305, %v283, 0
    %v328 = vsel %vm305, %v284, 0
    %330 = vmatpush.bf16.msra.mxu0 0
    %331 = vmatpush.bf16.msra.mxu0 0
    %332 = vmatpush.bf16.msra.mxu0 0
    %333 = vmatpush.bf16.msra.mxu0 0
    %334 = vmatpush.bf16.msra.mxu0 0
    %335 = vmatpush.bf16.msra.mxu0 0
    %336 = vmatpush.bf16.msra.mxu0 %v302
    %337 = vmatpush.bf16.msra.mxu0 %v301
    %338 = vmatmul.bf16.gmra.mxu0 %v307
    %v339 = vpop.f32.mrf.mxu0
    %v340 = vadd.f32 %v291, %v339
    %v341 = vpop.f32.mrf.mxu0
    %v342 = vadd.f32 %v291, %v341
    %343 = vmatmul.bf16.gmra.mxu0 %v310
    %v344 = vpop.f32.mrf.mxu0
    %v345 = vadd.f32 %v291, %v344
    %v346 = vpop.f32.mrf.mxu0
    %v347 = vadd.f32 %v291, %v346
    %348 = vmatmul.bf16.gmra.mxu0 %v313
    %v349 = vpop.f32.mrf.mxu0
    %v350 = vadd.f32 %v291, %v349
    %v351 = vpop.f32.mrf.mxu0
    %v352 = vadd.f32 %v291, %v351
    %353 = vmatmul.bf16.gmra.mxu0 %v316
    %v354 = vpop.f32.mrf.mxu0
    %v355 = vadd.f32 %v291, %v354
    %v356 = vpop.f32.mrf.mxu0
    %v357 = vadd.f32 %v291, %v356
    %358 = vmatmul.bf16.gmra.mxu0 %v319
    %v359 = vpop.f32.mrf.mxu0
    %v360 = vadd.f32 %v291, %v359
    %v361 = vpop.f32.mrf.mxu0
    %v362 = vadd.f32 %v291, %v361
    %363 = vmatmul.bf16.gmra.mxu0 %v322
    %v364 = vpop.f32.mrf.mxu0
    %v365 = vadd.f32 %v291, %v364
    %v366 = vpop.f32.mrf.mxu0
    %v367 = vadd.f32 %v291, %v366
    %368 = vmatmul.bf16.gmra.mxu0 %v325
    %v369 = vpop.f32.mrf.mxu0
    %v370 = vadd.f32 %v291, %v369
    %v371 = vpop.f32.mrf.mxu0
    %v372 = vadd.f32 %v291, %v371
    %373 = vmatmul.bf16.gmra.mxu0 %v328
    %v374 = vpop.f32.mrf.mxu0
    %v375 = vadd.f32 %v291, %v374
    %v376 = vpop.f32.mrf.mxu0
    %v377 = vadd.f32 %v291, %v376
    %378 = vdwg.mxu0
    %v379 = vmax.f32 %v340, 0.0
    %v380 = vmax.f32 %v342, 0.0
    %v381 = vmax.f32 %v345, 0.0
    %v382 = vmax.f32 %v347, 0.0
    %v383 = vmax.f32 %v350, 0.0
    %v384 = vmax.f32 %v352, 0.0
    %v385 = vmax.f32 %v355, 0.0
    %v386 = vmax.f32 %v357, 0.0
    %v387 = vmax.f32 %v360, 0.0
    %v388 = vmax.f32 %v362, 0.0
    %v389 = vmax.f32 %v365, 0.0
    %v390 = vmax.f32 %v367, 0.0
    %v391 = vmax.f32 %v370, 0.0
    %v392 = vmax.f32 %v372, 0.0
    %v393 = vmax.f32 %v375, 0.0
    %v394 = vmax.f32 %v377, 0.0
    %v395 = vld [vmem:[%s7] sm:$0x1]
    %v396 = vpack.c.bf16 %v380, %v379
    %v397 = vpack.c.bf16 %v382, %v381
    %v398 = vpack.c.bf16 %v384, %v383
    %v399 = vpack.c.bf16 %v386, %v385
    %v400 = vpack.c.bf16 %v388, %v387
    %v401 = vpack.c.bf16 %v390, %v389
    %v402 = vpack.c.bf16 %v392, %v391
    %v403 = vpack.c.bf16 %v394, %v393
    %s404 = sld [smem:[#allocation2]]
    %v405 = vstv %s404
    %v407 = vsel %vm305, %v395, 0
    %v410 = vsel %vm305, %v396, 0
    %v413 = vsel %vm305, %v397, 0
    %v416 = vsel %vm305, %v398, 0
    %v419 = vsel %vm305, %v399, 0
    %v422 = vsel %vm305, %v400, 0
    %v425 = vsel %vm305, %v401, 0
    %v428 = vsel %vm305, %v402, 0
    %v431 = vsel %vm305, %v403, 0
    %433 = vmatpush.bf16.xpose.msra.mxu0 %v431
    %434 = vmatpush.bf16.xpose.msra.mxu0 %v428
    %435 = vmatpush.bf16.xpose.msra.mxu0 %v425
    %436 = vmatpush.bf16.xpose.msra.mxu0 %v422
    %437 = vmatpush.bf16.xpose.msra.mxu0 %v419
    %438 = vmatpush.bf16.xpose.msra.mxu0 %v416
    %439 = vmatpush.bf16.xpose.msra.mxu0 %v413
    %440 = vmatpush.bf16.xpose.msra.mxu0 %v410
    %441 = vmatmul.bf16.gmra.mxu0 %v407
    %v442 = vpop.f32.mrf.mxu0
    %v443 = vadd.f32 %v405, %v442
    %v444 = vpop.f32.mrf.mxu0
    %445 = vdwg.mxu0
    %446 = vst [vmem:[#allocation3] sm:$0x1] %v443
    // Predicated region
    $region38: #{tpu_custom_call.1} parent=1 // pred_check
      _
    $region39: #{tpu_custom_call.1} parent=1 // pred_check_branch
      %448 = sbr.rel (0) target = $region41
    $region40: #{tpu_custom_call.1} parent=1 // pred_region
      %450 = vsyncadd [#allocation4], 0
      %s452 = sshll.u32 [#allocation3], 4
      %s453 = int_to_ptr.vmem [resolvable:$true] %s452
      %s454 = sshll.u32 %s9, 4
      %s455 = int_to_ptr.hbm [resolvable:$true] %s454
      %457 = dma.vmem_to_hbm [thread:$0]  %s453, 16, %s455, [#allocation4]
    $region41: #{tpu_custom_call.1} parent=1 // pred_fallthru
      _
    // Predicated region
    $region42: #{tpu_custom_call.1} parent=1 // pred_check
      _
    $region43: #{tpu_custom_call.1} parent=1 // pred_check_branch
      %459 = sbr.rel (0) target = $region45
    $region44: #{tpu_custom_call.1} parent=1 // pred_region
      %461 = dma.done [#allocation4], 16
    $region45: #{tpu_custom_call.1} parent=1 // pred_fallthru
      _
    %462 = vsyncpa [#allocation4], 1

</llo_original>
